<compile_context>
chip_gen: v7x
topology: tpu7x:2x2x1
jax: 0.10.0
libtpu: 0.0.40
codegen_flags: <defaults>
</compile_context>

<pallas_src>
import functools

import numpy as np
import jax
import jax.numpy as jnp
from jax.experimental import pallas as pl
from jax.experimental.pallas import tpu as pltpu


# --------------------------------------------------------------------------- roll probe
@functools.lru_cache(maxsize=None)
def _roll_sign():
    """Returns sign s so that pltpu.roll(v, (s*off) % L, axis=1)[:, i] == v[:, i+off].

    Determined empirically once with a tiny kernel so the shift-conv / dwconv
    lowering never depends on the roll direction convention.
    """
    def kern(x_ref, o_ref):
        o_ref[...] = pltpu.roll(x_ref[...], shift=1, axis=1)

    x = jnp.tile(jnp.arange(128, dtype=jnp.float32)[None, :], (8, 1))
    y = pl.pallas_call(kern, out_shape=jax.ShapeDtypeStruct((8, 128), jnp.float32))(x)
    # np.roll-like semantics (result[i] = x[i-shift]) puts x[0]=0 at index 1.
    return -1 if float(y[0, 1]) < 0.5 else 1


# --------------------------------------------------------------------------- fused kernel
def _hatb_kernel(temp_ref, x_ref, *rest, heads, H, W, roll_sign):
    (mask_ref,
     ln1_w, ln1_b, lfe0_w, lfe0_b, lfe1_w, lfe1_b,
     cca_w1, cca_b1, cca_w2, cca_b2,
     conv_w, conv_b, ln2_w, ln2_b,
     f1_pw1, f1_pw2, f1_dw1, f1_dw2, f1_pj,
     ln3_w, ln3_b, attn_pw, attn_dw, attn_pj,
     ln4_w, ln4_b,
     f2_pw1, f2_pw2, f2_dw1, f2_dw2, f2_pj,
     o_ref, attn_buf) = rest

    L = H * W
    x = x_ref[0]                                        # (C, L) float32

    # ---- helpers -----------------------------------------------------------
    def shift_src(v, off):
        # result[:, i] = v[:, (i + off) mod L]   (wrap-arounds are masked later)
        return pltpu.roll(v, shift=(roll_sign * off) % L, axis=1)

    def layer_norm(v, w_r, b_r):                        # WithBias LN over channels
        mu = jnp.mean(v, axis=0, keepdims=True)
        d = v - mu
        var = jnp.mean(d * d, axis=0, keepdims=True)
        return d * jax.lax.rsqrt(var + 1e-5) * w_r[...] + b_r[...]

    def conv1x1(w_r, v, b_r=None, relu=False):          # (Co,Ci) @ (Ci,L) [+b] [relu]
        y = jnp.dot(w_r[...], v, preferred_element_type=jnp.float32)
        if b_r is not None:
            y = y + b_r[...]
        if relu:
            y = jnp.maximum(y, 0.0)
        return y

    def shift_conv_dw(v):
        # ShiftConv2d1 depthwise pass: the reference indexes a size-1 weight dim,
        # so only the (ki,kj)=(0,1) tap is ever written (for in_channels >= 5).
        # => out[h, w] = in[h-1, w] with a zero first row.
        return shift_src(v, -W) * mask_ref[1]

    def dwconv3x3(v, dw_r):                             # depthwise 3x3, padding=1
        acc = v * dw_r[4]                               # centre tap, no mask needed
        for k in range(9):
            if k == 4:
                continue
            ki, kj = divmod(k, 3)
            off = (ki - 1) * W + (kj - 1)
            acc = acc + shift_src(v, off) * mask_ref[k] * dw_r[k]
        return acc

    def gelu(v):
        # exact (erf) GELU; erf via Abramowitz-Stegun 7.1.26 (|abs err| < 1.5e-7)
        # TODO(synk): switch to lax.erf once its Mosaic lowering is guaranteed.
        z = v * 0.7071067811865476
        az = jnp.abs(z)
        t = 1.0 / (1.0 + 0.3275911 * az)
        poly = ((((1.061405429 * t - 1.453152027) * t + 1.421413741) * t
                 - 0.284496736) * t + 0.254829592) * t
        erf = jnp.where(z >= 0.0, 1.0, -1.0) * (1.0 - poly * jnp.exp(-az * az))
        return 0.5 * v * (1.0 + erf)

    def feed_forward(v, pw1, pw2, dw1, dw2, pj):
        # BSConvU(dim -> 2*hidden) split into the two chunk halves up-front
        g1 = dwconv3x3(conv1x1(pw1, v), dw1)            # x1 half
        g2 = dwconv3x3(conv1x1(pw2, v), dw2)            # x2 half
        return conv1x1(pj, gelu(g1) * g2)               # project_out (no bias)

    def cca_gate(v):
        # SCAB: x1 * CCALayer(x1) == v * (v * sigmoid(SE(contrast(v) + avgpool(v))))
        mean = jnp.mean(v, axis=1, keepdims=True)                       # (C, 1)
        var = jnp.mean((v - mean) ** 2, axis=1, keepdims=True)
        stat = jnp.sqrt(var) + mean                                     # (C, 1)
        t = jnp.sum(cca_w1[...] * stat, axis=0, keepdims=True) + cca_b1[...]
        t = jnp.maximum(t, 0.0)                                         # (1, R)
        s = jnp.sum(cca_w2[...] * t, axis=1, keepdims=True) + cca_b2[...]
        s = 1.0 / (1.0 + jnp.exp(-s))                                   # (C, 1)
        return v * (v * s)

    def attention(v):
        C = v.shape[0]
        ch = C // heads
        qkv = dwconv3x3(conv1x1(attn_pw, v), attn_dw)                   # (3C, L)
        for h in range(heads):
            q = qkv[h * ch:(h + 1) * ch, :]
            k = qkv[C + h * ch:C + (h + 1) * ch, :]
            vv = qkv[2 * C + h * ch:2 * C + (h + 1) * ch, :]
            qn = q * jax.lax.rsqrt(
                jnp.maximum(jnp.sum(q * q, axis=1, keepdims=True), 1e-24))
            kn = k * jax.lax.rsqrt(
                jnp.maximum(jnp.sum(k * k, axis=1, keepdims=True), 1e-24))
            a = jax.lax.dot_general(qn, kn, (((1,), (1,)), ((), ())),
                                    preferred_element_type=jnp.float32)
            a = a * temp_ref[h]
            a = a - jnp.max(a, axis=1, keepdims=True)
            e = jnp.exp(a)
            p = e / jnp.sum(e, axis=1, keepdims=True)
            attn_buf[h * ch:(h + 1) * ch, :] = jnp.dot(
                p, vv, preferred_element_type=jnp.float32)
        return conv1x1(attn_pj, attn_buf[...])                          # project_out

    # ---- SCAB ----------------------------------------------------------------
    xn = layer_norm(x, ln1_w, ln1_b)
    t = conv1x1(lfe0_w, shift_conv_dw(xn), lfe0_b, relu=True)   # LFE conv0 + relu
    x1 = conv1x1(lfe1_w, shift_conv_dw(t), lfe1_b)              # LFE conv1
    x1 = cca_gate(x1)                                           # x1 * ca(x1)
    x1 = conv1x1(conv_w, x1, conv_b)                            # SCAB 1x1 conv
    y = x1 + x                                                  # + shortcut
    y = y + feed_forward(layer_norm(y, ln2_w, ln2_b),
                         f1_pw1, f1_pw2, f1_dw1, f1_dw2, f1_pj)

    # ---- BSAB ----------------------------------------------------------------
    z = y + attention(layer_norm(y, ln3_w, ln3_b))
    z = z + feed_forward(layer_norm(z, ln4_w, ln4_b),
                         f2_pw1, f2_pw2, f2_dw1, f2_dw2, f2_pj)

    o_ref[0] = z


# --------------------------------------------------------------------------- wrapper
def hatb_forward(x_nchw, p):
    B, C, H, W = x_nchw.shape
    L = H * W
    heads = p["num_heads"]
    assert C % heads == 0
    assert C >= 5, "ShiftConv2d1 single-tap reduction assumes in_channels >= n_div"

    # zero-padding validity masks for the 9 depthwise-3x3 taps (flattened H*W)
    rows = np.arange(L) // W
    cols = np.arange(L) % W
    m = np.zeros((9, 1, L), np.float32)
    for ki in range(3):
        for kj in range(3):
            rr, cc = rows + ki - 1, cols + kj - 1
            m[ki * 3 + kj, 0] = ((rr >= 0) & (rr < H) & (cc >= 0) & (cc < W))
    dw_mask = jnp.asarray(m)

    weights = [
        dw_mask,
        p["scab_ln1_w"], p["scab_ln1_b"],
        p["lfe0_w"], p["lfe0_b"], p["lfe1_w"], p["lfe1_b"],
        p["cca_w1t"], p["cca_b1"], p["cca_w2"], p["cca_b2"],
        p["scab_conv_w"], p["scab_conv_b"],
        p["scab_ln2_w"], p["scab_ln2_b"],
        p["scab_ffn"]["pw1"], p["scab_ffn"]["pw2"],
        p["scab_ffn"]["dw1"], p["scab_ffn"]["dw2"], p["scab_ffn"]["proj"],
        p["bsab_ln1_w"], p["bsab_ln1_b"],
        p["attn_pw_w"], p["attn_dw_w"], p["attn_proj_w"],
        p["bsab_ln2_w"], p["bsab_ln2_b"],
        p["bsab_ffn"]["pw1"], p["bsab_ffn"]["pw2"],
        p["bsab_ffn"]["dw1"], p["bsab_ffn"]["dw2"], p["bsab_ffn"]["proj"],
    ]

    def full_spec(a):
        nd = a.ndim
        return pl.BlockSpec(a.shape, lambda b, _n=nd: (0,) * _n)

    kern = functools.partial(_hatb_kernel, heads=heads, H=H, W=W,
                             roll_sign=_roll_sign())
    out = pl.pallas_call(
        kern,
        out_shape=jax.ShapeDtypeStruct((B, C, L), jnp.float32),
        grid=(B,),
        in_specs=([pl.BlockSpec(memory_space=pltpu.MemorySpace.SMEM),   # temperature
                   pl.BlockSpec((1, C, L), lambda b: (b, 0, 0))]        # x
                  + [full_spec(a) for a in weights]),
        out_specs=pl.BlockSpec((1, C, L), lambda b: (b, 0, 0)),
        scratch_shapes=[pltpu.VMEM((C, L), jnp.float32)],               # attn heads
        compiler_params=pltpu.CompilerParams(
            dimension_semantics=("parallel",)),
    )(p["temperature"], x_nchw.reshape(B, C, L), *weights)
    return out.reshape(B, C, H, W)


# --------------------------------------------------------------------------- params
def init_params(key, dim=16, num_heads=2, ffn_factor=2.66, exp_ratio=4, reduction=16):
    assert dim % num_heads == 0
    assert dim >= 5 and dim * exp_ratio >= 5        # single-tap ShiftConv regime
    red = max(dim // reduction, 1)
    hid = int(dim * ffn_factor)
    ks = iter(jax.random.split(key, 64))

    def mat(co, ci):                                # 1x1 conv weight, (out, in)
        return jax.random.normal(next(ks), (co, ci), jnp.float32) / np.sqrt(ci)

    def vec(c):                                     # bias, (out, 1)
        return jax.random.normal(next(ks), (c, 1), jnp.float32) * 0.01

    def dw9(c):                                     # depthwise 3x3 taps, (9, c, 1)
        return jax.random.normal(next(ks), (9, c, 1), jnp.float32) / 3.0

    def ffn():
        # bsconv pw/dw pre-split into the two chunk() halves; all FFN convs bias-free
        return {"pw1": mat(hid, dim), "pw2": mat(hid, dim),
                "dw1": dw9(hid), "dw2": dw9(hid), "proj": mat(dim, hid)}

    return {
        "num_heads": num_heads,
        "temperature": jnp.ones((num_heads,), jnp.float32),
        # SCAB
        "scab_ln1_w": jnp.ones((dim, 1), jnp.float32),
        "scab_ln1_b": jnp.zeros((dim, 1), jnp.float32),
        "lfe0_w": mat(dim * exp_ratio, dim), "lfe0_b": vec(dim * exp_ratio),
        "lfe1_w": mat(dim, dim * exp_ratio), "lfe1_b": vec(dim),
        # CCA squeeze-excite: w1 stored transposed (in, red) so the tiny MLP is
        # pure broadcast + reduce inside the kernel.
        "cca_w1t": jax.random.normal(next(ks), (dim, red), jnp.float32) / np.sqrt(dim),
        "cca_b1": jax.random.normal(next(ks), (1, red), jnp.float32) * 0.01,
        "cca_w2": jax.random.normal(next(ks), (dim, red), jnp.float32) / np.sqrt(red),
        "cca_b2": vec(dim),
        "scab_conv_w": mat(dim, dim), "scab_conv_b": vec(dim),
        "scab_ln2_w": jnp.ones((dim, 1), jnp.float32),
        "scab_ln2_b": jnp.zeros((dim, 1), jnp.float32),
        "scab_ffn": ffn(),
        # BSAB
        "bsab_ln1_w": jnp.ones((dim, 1), jnp.float32),
        "bsab_ln1_b": jnp.zeros((dim, 1), jnp.float32),
        "attn_pw_w": mat(3 * dim, dim),
        "attn_dw_w": dw9(3 * dim),
        "attn_proj_w": mat(dim, dim),
        "bsab_ln2_w": jnp.ones((dim, 1), jnp.float32),
        "bsab_ln2_b": jnp.zeros((dim, 1), jnp.float32),
        "bsab_ffn": ffn(),
    }


# --------------------------------------------------------------------------- main
if __name__ == "__main__":
    dim, num_heads, B, H, W = 16, 2, 2, 16, 16
    key = jax.random.PRNGKey(0)
    kp, kx = jax.random.split(key)
    params = init_params(kp, dim=dim, num_heads=num_heads)
    x = jax.random.normal(kx, (B, dim, H, W), jnp.float32)     # NCHW, like PyTorch

    _ = _roll_sign()                                           # prime the roll probe
    fwd = jax.jit(lambda a: hatb_forward(a, params))
    y = fwd(x)
    jax.block_until_ready(y)
    assert y.shape == (B, dim, H, W) and y.dtype == jnp.float32
    assert bool(jnp.all(jnp.isfinite(y)))
    print("KERNEL_OK")
</pallas_src>

<mosaic_0001>
module attributes {stable_mosaic.version = 11 : i64} {
  func.func @kern(%arg0: memref<8x128xf32, #tpu.memory_space<vmem>>, %arg1: memref<8x128xf32, #tpu.memory_space<vmem>>) attributes {dimension_semantics = [], scalar_prefetch = 0 : i64, scratch_operands = 0 : i64, tpu.core_type = #tpu.core_type<tc>} {
    %c0 = arith.constant 0 : index
    %c0_0 = arith.constant 0 : index
    %0 = vector.load %arg0[%c0, %c0_0] : memref<8x128xf32, #tpu.memory_space<vmem>>, vector<8x128xf32>
    %c1_i32 = arith.constant 1 : i32
    %1 = tpu.dynamic_rotate %0 by %c1_i32 dim 1 : vector<8x128xf32>, i32 -> vector<8x128xf32>
    %c0_1 = arith.constant 0 : index
    %c0_2 = arith.constant 0 : index
    %2 = vector.load %arg1[%c0_1, %c0_2] : memref<8x128xf32, #tpu.memory_space<vmem>>, vector<8x128xf32>
    tpu.vector_store %arg1[%c0_1, %c0_2], %1 {strides = array<i32>} : memref<8x128xf32, #tpu.memory_space<vmem>>, vector<8x128xf32>,
    return
  }
}

</mosaic_0001>

<llo_original>
// kernel: tpu_custom_call.1
$region0: #{tpu_custom_call.1}
  #allocation0 [shape = 'u32[]', space=smem, size = 0x4, offset = 0x4, fixed_abs, tag = 'smem constant byte address 0x4 - core index']
  #allocation1 [shape = 'u32[144,128]{1,0:T(1,128)}', space=vmem, size = 0x12000, scoped, tag = 'internal scratch']
  %s0 = inlined_call_operand.hbm [shape: f32[8,128], index: 0, kind: input, shape index: {}]
  %s1 = inlined_call_operand.hbm [shape: f32[8,128], index: 1, kind: output, shape index: {}]
  %s2 = sld [smem:[#allocation0]]
  $region18: #{tpu_custom_call.1} parent=0
    _
  %s4 = ssub.s32 1, %s2
  %s5 = scalar_select 0, %s4, %s2
  $region1: #{tpu_custom_call.1} parent=0
    #allocation2 [shape = 'u8[4096]{0}', space=vmem, size = 0x1000, scoped, tag = 'input window, operand 0, single buffered']
    #allocation3 [shape = 's32[1]{0}', space=sflag, size = 0x4, scoped, tag = 'scoped memory for tpu_custom_call.1']
    #allocation4 [shape = 's32[1]{0}', space=sflag, size = 0x4, scoped, tag = 'scoped memory for tpu_custom_call.1']
    #allocation5 [shape = 'u8[4096]{0}', space=vmem, size = 0x1000, scoped, tag = 'output window, operand 0, single buffered']
    %6 = vsyncpa [#allocation3], 0
    %7 = vsyncpa [#allocation4], 0
    // Predicated region
    $region2: #{tpu_custom_call.1} parent=1 // pred_check
      _
    $region3: #{tpu_custom_call.1} parent=1 // pred_check_branch
      %9 = sbr.rel (0) target = $region5
    $region4: #{tpu_custom_call.1} parent=1 // pred_region
      %s11 = ssub.s32 128, 128
      %12 = vsyncadd [#allocation3], %s11
      %s14 = sshll.u32 [#allocation2], 4
      %s15 = int_to_ptr.vmem [resolvable:$true] %s14
      %17 = dma.hbm_to_vmem [thread:$0]  %s0, 128, %s15, [#allocation3]
    $region5: #{tpu_custom_call.1} parent=1 // pred_fallthru
      _
    // Predicated region
    $region6: #{tpu_custom_call.1} parent=1 // pred_check
      _
    $region7: #{tpu_custom_call.1} parent=1 // pred_check_branch
      %19 = sbr.rel (0) target = $region9
    $region8: #{tpu_custom_call.1} parent=1 // pred_region
      %20 = dma.done [#allocation3], 128
    $region9: #{tpu_custom_call.1} parent=1 // pred_fallthru
      _
    %v21 = vld [vmem:[#allocation2] sm:$0xff]
    %22 = vrot.lane.b32.xlu0 %v21, 1
    %v23 = vpop.permute.xlu0 %22
    %24 = vst [vmem:[#allocation5] sm:$0xff] %v23
    // Predicated region
    $region10: #{tpu_custom_call.1} parent=1 // pred_check
      _
    $region11: #{tpu_custom_call.1} parent=1 // pred_check_branch
      %26 = sbr.rel (0) target = $region13
    $region12: #{tpu_custom_call.1} parent=1 // pred_region
      %s28 = ssub.s32 128, 128
      %29 = vsyncadd [#allocation4], %s28
      %s31 = sshll.u32 [#allocation5], 4
      %s32 = int_to_ptr.vmem [resolvable:$true] %s31
      %34 = dma.vmem_to_hbm [thread:$0]  %s32, 128, %s1, [#allocation4]
    $region13: #{tpu_custom_call.1} parent=1 // pred_fallthru
      _
    // Predicated region
    $region14: #{tpu_custom_call.1} parent=1 // pred_check
      _
    $region15: #{tpu_custom_call.1} parent=1 // pred_check_branch
      %36 = sbr.rel (0) target = $region17
    $region16: #{tpu_custom_call.1} parent=1 // pred_region
      %37 = dma.done [#allocation4], 128
    $region17: #{tpu_custom_call.1} parent=1 // pred_fallthru
      _
    %38 = vsyncpa [#allocation3], 1
    %39 = vsyncpa [#allocation4], 1

</llo_original>
